<compile_context>
chip_gen: v7x
topology: tpu7x:2x2x1
jax: 0.10.0
libtpu: 0.0.40
codegen_flags: <defaults>
</compile_context>

<pallas_src>
import jax
import jax.numpy as jnp
from jax.experimental import pallas as pl
from jax.experimental.pallas import tpu as pltpu

_FEAT_ROWS = 16  # 8-aligned sublane-row count covering features 7 (large), 8 (small)


def _size_kernel(a_ref, z_ref, out_ref):
    # a_ref   : (2, TB)  VMEM -- transposed one-hot size selector
    # z_ref   : (16, TB) VMEM -- transposed feature rows 0..15 (rows 7, 8 used)
    # out_ref : (1, TB)  VMEM -- lane-dense output row
    z_size = z_ref[7:9, :].astype(jnp.float32)      # (2, TB): [large; small]
    a = a_ref[...].astype(jnp.float32)              # (2, TB)
    out_ref[...] = jnp.sum(a * z_size, axis=0, keepdims=True)


def slot_attention_size(z, a, *, batch_tile=2048):
    """z: (B, D>=9); a: (B, 2) one-hot. Returns (B,) float32 probabilities."""
    B, D = z.shape
    assert D >= 9 and a.shape == (B, 2)

    # Put batch on the lane axis, features on sublanes. In production this
    # layout would come directly from the upstream (fused) producer.
    zt = jnp.transpose(z)            # (D, B)
    at = jnp.transpose(a)            # (2, B)

    # Lane tile over the batch: multiple of 128, capped at `batch_tile`.
    tb = min(batch_tile, 128 * pl.cdiv(B, 128))
    bp = tb * pl.cdiv(B, tb)
    if bp != B:
        zt = jnp.pad(zt, ((0, 0), (0, bp - B)))
        at = jnp.pad(at, ((0, 0), (0, bp - B)))

    out = pl.pallas_call(
        _size_kernel,
        out_shape=jax.ShapeDtypeStruct((1, bp), jnp.float32),
        grid_spec=pltpu.PrefetchScalarGridSpec(
            num_scalar_prefetch=0,
            grid=(bp // tb,),
            in_specs=[
                pl.BlockSpec((2, tb), lambda i: (0, i)),           # a^T
                pl.BlockSpec((_FEAT_ROWS, tb), lambda i: (0, i)),  # z^T rows 0..15
            ],
            out_specs=pl.BlockSpec((1, tb), lambda i: (0, i)),
        ),
        compiler_params=pltpu.CompilerParams(
            dimension_semantics=("parallel",)),
    )(at, zt)
    return out[0, :B]                # lane-dense row -> (B,)


def _reference(z, a):
    return jnp.sum(a * z[:, 7:9], axis=1)


if __name__ == "__main__":
    key = jax.random.PRNGKey(0)
    B, D = 8, 19                                   # D = 19-dim object vector
    kz, ka = jax.random.split(key)
    z = jax.random.uniform(kz, (B, D), dtype=jnp.float32)
    size_idx = jax.random.randint(ka, (B,), 0, 2)
    a = jax.nn.one_hot(size_idx, 2, dtype=jnp.float32)   # one-hot size selector

    out = slot_attention_size(z, a)
    out = jax.block_until_ready(out)

    ref = _reference(z, a)
    assert out.shape == (B,)
    assert jnp.allclose(out, ref, atol=1e-6, rtol=1e-6)
    print("KERNEL_OK")
</pallas_src>

<mosaic_0001>
module attributes {stable_mosaic.version = 11 : i64} {
  func.func @_size_kernel(%arg0: i32, %arg1: memref<2x128xf32, #tpu.memory_space<vmem>>, %arg2: memref<16x128xf32, #tpu.memory_space<vmem>>, %arg3: memref<1x128xf32, #tpu.memory_space<vmem>>) attributes {dimension_semantics = [#tpu.dimension_semantics<parallel>], iteration_bounds = array<i64: 1>, scalar_prefetch = 0 : i64, scratch_operands = 0 : i64, tpu.core_type = #tpu.core_type<tc>, window_params = [{transform_indices = @transform_0, window_bounds = array<i64: 2, 128>}, {transform_indices = @transform_1, window_bounds = array<i64: 16, 128>}, {transform_indices = @transform_2, window_bounds = array<i64: 1, 128>}]} {
    %c7 = arith.constant 7 : index
    %c0 = arith.constant 0 : index
    %0 = vector.load %arg2[%c7, %c0] : memref<16x128xf32, #tpu.memory_space<vmem>>, vector<2x128xf32>
    %c0_0 = arith.constant 0 : index
    %c0_1 = arith.constant 0 : index
    %1 = vector.load %arg1[%c0_0, %c0_1] : memref<2x128xf32, #tpu.memory_space<vmem>>, vector<2x128xf32>
    %2 = arith.mulf %1, %0 : vector<2x128xf32>
    %cst = arith.constant dense<0.000000e+00> : vector<128xf32>
    %3 = vector.multi_reduction <add>, %2, %cst [0] : vector<2x128xf32> to vector<128xf32>
    %4 = vector.shape_cast %3 : vector<128xf32> to vector<1x128xf32>
    %c0_2 = arith.constant 0 : index
    %c0_3 = arith.constant 0 : index
    %5 = vector.load %arg3[%c0_2, %c0_3] : memref<1x128xf32, #tpu.memory_space<vmem>>, vector<1x128xf32>
    tpu.vector_store %arg3[%c0_2, %c0_3], %4 {strides = array<i32>} : memref<1x128xf32, #tpu.memory_space<vmem>>, vector<1x128xf32>,
    return
  }
  func.func @transform_0(%arg0: i32) -> (i32, i32) {
    %c0_i32 = arith.constant 0 : i32
    %c0_i32_0 = arith.constant 0 : i32
    return %c0_i32, %arg0 : i32, i32
  }
  func.func @transform_1(%arg0: i32) -> (i32, i32) {
    %c0_i32 = arith.constant 0 : i32
    %c0_i32_0 = arith.constant 0 : i32
    return %c0_i32, %arg0 : i32, i32
  }
  func.func @transform_2(%arg0: i32) -> (i32, i32) {
    %c0_i32 = arith.constant 0 : i32
    %c0_i32_0 = arith.constant 0 : i32
    return %c0_i32, %arg0 : i32, i32
  }
}

</mosaic_0001>

<llo_original>
// kernel: tpu_custom_call.1
$region0: #{tpu_custom_call.1}
  #allocation0 [shape = 'u32[]', space=smem, size = 0x4, offset = 0x4, fixed_abs, tag = 'smem constant byte address 0x4 - core index']
  #allocation1 [shape = 'u32[144,128]{1,0:T(1,128)}', space=vmem, size = 0x12000, scoped, tag = 'internal scratch']
  %s0 = inlined_call_operand.hbm [shape: f32[2,128], index: 0, kind: input, shape index: {}]
  %s1 = inlined_call_operand.hbm [shape: f32[19,128], index: 1, kind: input, shape index: {}]
  %s2 = inlined_call_operand.hbm [shape: f32[1,128], index: 2, kind: output, shape index: {}]
  %s3 = sld [smem:[#allocation0]]
  $region26: #{tpu_custom_call.1} parent=0
    _
  %s5 = ssub.s32 1, %s3
  %s6 = scalar_select 0, %s5, %s3
  $region1: #{tpu_custom_call.1} parent=0
    #allocation2 [shape = 'u8[1024]{0}', space=vmem, size = 0x400, scoped, tag = 'input window, operand 0, single buffered']
    #allocation3 [shape = 's32[1]{0}', space=sflag, size = 0x4, scoped, tag = 'scoped memory for tpu_custom_call.1']
    #allocation4 [shape = 's32[1]{0}', space=sflag, size = 0x4, scoped, tag = 'scoped memory for tpu_custom_call.1']
    #allocation5 [shape = 'u8[8192]{0}', space=vmem, size = 0x2000, scoped, tag = 'input window, operand 1, single buffered']
    #allocation6 [shape = 's32[1]{0}', space=sflag, size = 0x4, scoped, tag = 'scoped memory for tpu_custom_call.1']
    #allocation7 [shape = 'u8[512]{0}', space=vmem, size = 0x400, scoped, tag = 'output window, operand 0, single buffered']
    %7 = vsyncpa [#allocation3], 0
    %8 = vsyncpa [#allocation6], 0
    %9 = vsyncpa [#allocation4], 0
    // Predicated region
    $region2: #{tpu_custom_call.1} parent=1 // pred_check
      _
    $region3: #{tpu_custom_call.1} parent=1 // pred_check_branch
      %11 = sbr.rel (0) target = $region5
    $region4: #{tpu_custom_call.1} parent=1 // pred_region
      %s13 = ssub.s32 32, 32
      %14 = vsyncadd [#allocation3], %s13
      %s16 = sshll.u32 [#allocation2], 4
      %s17 = int_to_ptr.vmem [resolvable:$true] %s16
      %19 = dma.hbm_to_vmem [thread:$0]  %s0, 32, %s17, [#allocation3]
    $region5: #{tpu_custom_call.1} parent=1 // pred_fallthru
      _
    // Predicated region
    $region6: #{tpu_custom_call.1} parent=1 // pred_check
      _
    $region7: #{tpu_custom_call.1} parent=1 // pred_check_branch
      %21 = sbr.rel (0) target = $region9
    $region8: #{tpu_custom_call.1} parent=1 // pred_region
      %s23 = ssub.s32 256, 256
      %24 = vsyncadd [#allocation6], %s23
      %s25 = sshll.u32 [#allocation5], 4
      %s26 = int_to_ptr.vmem [resolvable:$true] %s25
      %31 = dma.hbm_to_vmem [thread:$0]  %s1, 256, %s26, [#allocation6], 128, 128, 8
    $region9: #{tpu_custom_call.1} parent=1 // pred_fallthru
      _
    // Predicated region
    $region10: #{tpu_custom_call.1} parent=1 // pred_check
      _
    $region11: #{tpu_custom_call.1} parent=1 // pred_check_branch
      %33 = sbr.rel (0) target = $region13
    $region12: #{tpu_custom_call.1} parent=1 // pred_region
      %34 = dma.done [#allocation3], 32
    $region13: #{tpu_custom_call.1} parent=1 // pred_fallthru
      _
    // Predicated region
    $region14: #{tpu_custom_call.1} parent=1 // pred_check
      _
    $region15: #{tpu_custom_call.1} parent=1 // pred_check_branch
      %36 = sbr.rel (0) target = $region17
    $region16: #{tpu_custom_call.1} parent=1 // pred_region
      %37 = dma.done [#allocation6], 256
    $region17: #{tpu_custom_call.1} parent=1 // pred_fallthru
      _
    %v38 = vld [vmem:[#allocation5 + $0x7] sm:$0x3]
    %v39 = vld [vmem:[#allocation2] sm:$0x3]
    %v40 = vmul.f32 %v39, %v38
    %vm41 = vcmask 1041408
    %v42 = vsel %vm41, %v40, 0.0
    %v43 = vrot.slane %v42, 4
    %v44 = vadd.f32 %v42, %v43
    %v45 = vrot.slane %v44, 2
    %v46 = vadd.f32 %v44, %v45
    %v47 = vrot.slane %v46, 1
    %v48 = vadd.f32 %v46, %v47
    %49 = vst [vmem:[#allocation7] sm:$0x1] %v48
    // Predicated region
    $region18: #{tpu_custom_call.1} parent=1 // pred_check
      _
    $region19: #{tpu_custom_call.1} parent=1 // pred_check_branch
      %51 = sbr.rel (0) target = $region21
    $region20: #{tpu_custom_call.1} parent=1 // pred_region
      %s53 = ssub.s32 16, 16
      %54 = vsyncadd [#allocation4], %s53
      %s56 = sshll.u32 [#allocation7], 4
      %s57 = int_to_ptr.vmem [resolvable:$true] %s56
      %59 = dma.vmem_to_hbm [thread:$0]  %s57, 16, %s2, [#allocation4]
    $region21: #{tpu_custom_call.1} parent=1 // pred_fallthru
      _
    // Predicated region
    $region22: #{tpu_custom_call.1} parent=1 // pred_check
      _
    $region23: #{tpu_custom_call.1} parent=1 // pred_check_branch
      %61 = sbr.rel (0) target = $region25
    $region24: #{tpu_custom_call.1} parent=1 // pred_region
      %62 = dma.done [#allocation4], 16
    $region25: #{tpu_custom_call.1} parent=1 // pred_fallthru
      _
    %63 = vsyncpa [#allocation3], 1
    %64 = vsyncpa [#allocation6], 1
    %65 = vsyncpa [#allocation4], 1

</llo_original>
